<compile_context>
chip_gen: v5e
topology: v5e:2x2
jax: 0.10.0
libtpu: 0.0.40
codegen_flags: <defaults>
</compile_context>

<pallas_src>
import jax
import jax.numpy as jnp
from jax.experimental import pallas as pl
from jax.experimental.pallas import tpu as pltpu


def residual_network_kernel(x_ref, slab_ref, o_ref):
    """One row-tile of the full forward pass.

    x_ref   : (tm, D)           input activations                  [VMEM]
    slab_ref: (2L+1, D+1, D)    packed params, weights in (in,out)
                                layout, bias in sublane row D;
                                tile 2L holds the output head       [VMEM]
    o_ref   : (tm, 1)           sigmoid output (squeezed outside)   [VMEM]
    """
    D = x_ref.shape[-1]
    n_layers = (slab_ref.shape[0] - 1) // 2

    h = x_ref[...].astype(jnp.float32)

    # n_layers is a small compile-time constant -> static Python loop with
    # static ref indexing (each slice below is a direct VMEM load, no
    # load-then-slice of a materialized block).
    for i in range(n_layers):
        w1 = slab_ref[2 * i, 0:D, :]           # (D, D) weights, (in, out)
        b1 = slab_ref[2 * i, D:D + 1, :]       # (1, D) bias row
        w2 = slab_ref[2 * i + 1, 0:D, :]
        b2 = slab_ref[2 * i + 1, D:D + 1, :]

        # ResidualBlock: layer2(relu(layer1(h))) + h   (then Sequential ReLU)
        # bf16 only at the MXU operands; accumulate and do elementwise in f32.
        a = jnp.dot(h.astype(jnp.bfloat16), w1.astype(jnp.bfloat16),
                    preferred_element_type=jnp.float32)
        a = jnp.maximum(a + b1, 0.0)
        r = jnp.dot(a.astype(jnp.bfloat16), w2.astype(jnp.bfloat16),
                    preferred_element_type=jnp.float32)
        h = jnp.maximum(r + b2 + h, 0.0)

    # Final Linear(D, 1) + Sigmoid as a VPU multiply + XLU lane reduce
    # (avoids a serialized 1-column MXU round-trip at the tail of the chain).
    # The output bias lives at lane 0 of an otherwise-zero row, so it is
    # picked up by the same lane reduction: sum(h*wo + bo_row) = h.wo + bo.
    wo_row = slab_ref[2 * n_layers, 0:1, :]    # (1, D) head weight
    bo_row = slab_ref[2 * n_layers, 1:2, :]    # (1, D) bias at lane 0, else 0
    logit = jnp.sum(h * wo_row + bo_row, axis=-1, keepdims=True)
    o_ref[...] = jax.nn.sigmoid(logit).astype(o_ref.dtype)


def residual_network_forward(x, slab, *, tile_m=256):
    """x: (B, D); slab: (2L+1, D+1, D) packed parameters. Returns (B,)."""
    B, D = x.shape
    tm = min(tile_m, B)                 # small batches: one full-rows block
    grid_m = pl.cdiv(B, tm)
    b_pad = grid_m * tm
    xp = x if b_pad == B else jnp.pad(x, ((0, b_pad - B), (0, 0)))

    out = pl.pallas_call(
        residual_network_kernel,
        out_shape=jax.ShapeDtypeStruct((b_pad, 1), jnp.float32),
        grid=(grid_m,),
        in_specs=[
            pl.BlockSpec((tm, D), lambda i: (i, 0)),          # streamed rows
            pl.BlockSpec(slab.shape, lambda i: (0, 0, 0)),     # resident slab
        ],
        out_specs=pl.BlockSpec((tm, 1), lambda i: (i, 0)),
        compiler_params=pltpu.CompilerParams(
            # Row tiles are independent -> megacore-shard them on v7x.
            dimension_semantics=("parallel",)),
    )(xp, slab)

    # PyTorch forward ends with .squeeze(): (B, 1) -> (B,)  (demo uses B > 1)
    return jnp.squeeze(out[:B], axis=-1)


def init_raw_params(key, n_layers, input_size):
    """Deterministic synthetic params in nn.Linear layout ((out, in) weights)."""
    D = input_size
    keys = jax.random.split(key, 6)
    scale = 1.0 / jnp.sqrt(jnp.float32(D))
    w1 = jax.random.uniform(keys[0], (n_layers, D, D), jnp.float32, -scale, scale)
    b1 = jax.random.uniform(keys[1], (n_layers, D), jnp.float32, -scale, scale)
    w2 = jax.random.uniform(keys[2], (n_layers, D, D), jnp.float32, -scale, scale)
    b2 = jax.random.uniform(keys[3], (n_layers, D), jnp.float32, -scale, scale)
    wo = jax.random.uniform(keys[4], (D,), jnp.float32, -scale, scale)
    bo = jax.random.uniform(keys[5], (), jnp.float32, -scale, scale)
    return w1, b1, w2, b2, wo, bo


def pack_params(w1, b1, w2, b2, wo, bo):
    """Pack everything into one (2L+1, D+1, D) slab (single kernel operand).

    Tile 2i   : layer1 of block i  -> rows 0..D-1 = W1.T (in,out), row D = b1
    Tile 2i+1 : layer2 of block i  -> rows 0..D-1 = W2.T (in,out), row D = b2
    Tile 2L   : output head        -> row 0 = wo, row 1 lane 0 = bo, rest 0
    """
    L, D, _ = w1.shape
    slab = jnp.zeros((2 * L + 1, D + 1, D), jnp.float32)
    slab = slab.at[0:2 * L:2, 0:D, :].set(jnp.transpose(w1, (0, 2, 1)))
    slab = slab.at[0:2 * L:2, D, :].set(b1)
    slab = slab.at[1:2 * L:2, 0:D, :].set(jnp.transpose(w2, (0, 2, 1)))
    slab = slab.at[1:2 * L:2, D, :].set(b2)
    slab = slab.at[2 * L, 0, :].set(wo)
    slab = slab.at[2 * L, 1, 0].set(bo)
    return slab


def reference_forward(x, w1, b1, w2, b2, wo, bo):
    """Plain-JAX f32 reference mirroring the PyTorch module."""
    h = x.astype(jnp.float32)
    for i in range(w1.shape[0]):
        a = jnp.maximum(h @ w1[i].T + b1[i], 0.0)
        h = jnp.maximum(a @ w2[i].T + b2[i] + h, 0.0)
    logit = h @ wo + bo
    return jax.nn.sigmoid(logit)


if __name__ == "__main__":
    n_layers = 3
    batch = 8        # NOTE: wall time is ~flat up to B~128 (v5e) / ~256 (v6e/v7x);
    input_size = 32  # batch more requests per call in production to fill the MXU.

    key = jax.random.PRNGKey(0)
    k_x, k_p = jax.random.split(key)
    x = jax.random.normal(k_x, (batch, input_size), jnp.float32)
    raw = init_raw_params(k_p, n_layers, input_size)
    slab = pack_params(*raw)

    y = residual_network_forward(x, slab)
    y = jax.block_until_ready(y)

    y_ref = reference_forward(x, *raw)
    assert y.shape == (batch,), y.shape
    # Tolerance loosened vs. the pure-f32 version because the kernel uses
    # bf16 MXU operands (f32 accumulation / elementwise).
    assert jnp.allclose(y, y_ref, atol=2e-2, rtol=2e-2), float(
        jnp.max(jnp.abs(y - y_ref)))

    print("KERNEL_OK")
</pallas_src>

<mosaic_0001>
module attributes {stable_mosaic.version = 11 : i64} {
  func.func @residual_network_kernel(%arg0: i32, %arg1: memref<8x32xf32, #tpu.memory_space<vmem>>, %arg2: memref<7x33x32xf32, #tpu.memory_space<vmem>>, %arg3: memref<8x1xf32, #tpu.memory_space<vmem>>) attributes {dimension_semantics = [#tpu.dimension_semantics<parallel>], iteration_bounds = array<i64: 1>, scalar_prefetch = 0 : i64, scratch_operands = 0 : i64, tpu.core_type = #tpu.core_type<tc>, window_params = [{transform_indices = @transform_0, window_bounds = array<i64: 8, 32>}, {pipeline_mode = #tpu.pipeline_mode<synchronous>, transform_indices = @transform_1, window_bounds = array<i64: 7, 33, 32>}, {transform_indices = @transform_2, window_bounds = array<i64: 8, 1>}]} {
    %c0 = arith.constant 0 : index
    %c0_0 = arith.constant 0 : index
    %0 = vector.load %arg1[%c0, %c0_0] : memref<8x32xf32, #tpu.memory_space<vmem>>, vector<8x32xf32>
    %c0_1 = arith.constant 0 : index
    %c0_2 = arith.constant 0 : index
    %c0_3 = arith.constant 0 : index
    %1 = vector.load %arg2[%c0_1, %c0_2, %c0_3] : memref<7x33x32xf32, #tpu.memory_space<vmem>>, vector<1x32x32xf32>
    %2 = vector.shape_cast %1 : vector<1x32x32xf32> to vector<32x32xf32>
    %c0_4 = arith.constant 0 : index
    %c32 = arith.constant 32 : index
    %c0_5 = arith.constant 0 : index
    %3 = vector.load %arg2[%c0_4, %c32, %c0_5] : memref<7x33x32xf32, #tpu.memory_space<vmem>>, vector<1x1x32xf32>
    %4 = vector.shape_cast %3 : vector<1x1x32xf32> to vector<1x32xf32>
    %c1 = arith.constant 1 : index
    %c0_6 = arith.constant 0 : index
    %c0_7 = arith.constant 0 : index
    %5 = vector.load %arg2[%c1, %c0_6, %c0_7] : memref<7x33x32xf32, #tpu.memory_space<vmem>>, vector<1x32x32xf32>
    %6 = vector.shape_cast %5 : vector<1x32x32xf32> to vector<32x32xf32>
    %c1_8 = arith.constant 1 : index
    %c32_9 = arith.constant 32 : index
    %c0_10 = arith.constant 0 : index
    %7 = vector.load %arg2[%c1_8, %c32_9, %c0_10] : memref<7x33x32xf32, #tpu.memory_space<vmem>>, vector<1x1x32xf32>
    %8 = vector.shape_cast %7 : vector<1x1x32xf32> to vector<1x32xf32>
    %9 = arith.truncf %0 : vector<8x32xf32> to vector<8x32xbf16>
    %10 = arith.truncf %2 : vector<32x32xf32> to vector<32x32xbf16>
    %cst = arith.constant dense<0.000000e+00> : vector<8x32xf32>
    %11 = tpu.matmul %9, %10, %cst {dimension_numbers = #tpu.dot_dimension_numbers<[1], [0], [0], [1], [0, 0, 1, 1], [], []>} : vector<8x32xbf16>, vector<32x32xbf16>, vector<8x32xf32> -> vector<8x32xf32>
    %12 = vector.broadcast %4 : vector<1x32xf32> to vector<8x32xf32>
    %13 = arith.addf %11, %12 : vector<8x32xf32>
    %cst_11 = arith.constant 0.000000e+00 : f32
    %14 = vector.broadcast %cst_11 : f32 to vector<8x32xf32>
    %15 = arith.maximumf %13, %14 : vector<8x32xf32>
    %16 = arith.truncf %15 : vector<8x32xf32> to vector<8x32xbf16>
    %17 = arith.truncf %6 : vector<32x32xf32> to vector<32x32xbf16>
    %cst_12 = arith.constant dense<0.000000e+00> : vector<8x32xf32>
    %18 = tpu.matmul %16, %17, %cst_12 {dimension_numbers = #tpu.dot_dimension_numbers<[1], [0], [0], [1], [0, 0, 1, 1], [], []>} : vector<8x32xbf16>, vector<32x32xbf16>, vector<8x32xf32> -> vector<8x32xf32>
    %19 = vector.broadcast %8 : vector<1x32xf32> to vector<8x32xf32>
    %20 = arith.addf %18, %19 : vector<8x32xf32>
    %21 = arith.addf %20, %0 : vector<8x32xf32>
    %cst_13 = arith.constant 0.000000e+00 : f32
    %22 = vector.broadcast %cst_13 : f32 to vector<8x32xf32>
    %23 = arith.maximumf %21, %22 : vector<8x32xf32>
    %c2 = arith.constant 2 : index
    %c0_14 = arith.constant 0 : index
    %c0_15 = arith.constant 0 : index
    %24 = vector.load %arg2[%c2, %c0_14, %c0_15] : memref<7x33x32xf32, #tpu.memory_space<vmem>>, vector<1x32x32xf32>
    %25 = vector.shape_cast %24 : vector<1x32x32xf32> to vector<32x32xf32>
    %c2_16 = arith.constant 2 : index
    %c32_17 = arith.constant 32 : index
    %c0_18 = arith.constant 0 : index
    %26 = vector.load %arg2[%c2_16, %c32_17, %c0_18] : memref<7x33x32xf32, #tpu.memory_space<vmem>>, vector<1x1x32xf32>
    %27 = vector.shape_cast %26 : vector<1x1x32xf32> to vector<1x32xf32>
    %c3 = arith.constant 3 : index
    %c0_19 = arith.constant 0 : index
    %c0_20 = arith.constant 0 : index
    %28 = vector.load %arg2[%c3, %c0_19, %c0_20] : memref<7x33x32xf32, #tpu.memory_space<vmem>>, vector<1x32x32xf32>
    %29 = vector.shape_cast %28 : vector<1x32x32xf32> to vector<32x32xf32>
    %c3_21 = arith.constant 3 : index
    %c32_22 = arith.constant 32 : index
    %c0_23 = arith.constant 0 : index
    %30 = vector.load %arg2[%c3_21, %c32_22, %c0_23] : memref<7x33x32xf32, #tpu.memory_space<vmem>>, vector<1x1x32xf32>
    %31 = vector.shape_cast %30 : vector<1x1x32xf32> to vector<1x32xf32>
    %32 = arith.truncf %23 : vector<8x32xf32> to vector<8x32xbf16>
    %33 = arith.truncf %25 : vector<32x32xf32> to vector<32x32xbf16>
    %cst_24 = arith.constant dense<0.000000e+00> : vector<8x32xf32>
    %34 = tpu.matmul %32, %33, %cst_24 {dimension_numbers = #tpu.dot_dimension_numbers<[1], [0], [0], [1], [0, 0, 1, 1], [], []>} : vector<8x32xbf16>, vector<32x32xbf16>, vector<8x32xf32> -> vector<8x32xf32>
    %35 = vector.broadcast %27 : vector<1x32xf32> to vector<8x32xf32>
    %36 = arith.addf %34, %35 : vector<8x32xf32>
    %cst_25 = arith.constant 0.000000e+00 : f32
    %37 = vector.broadcast %cst_25 : f32 to vector<8x32xf32>
    %38 = arith.maximumf %36, %37 : vector<8x32xf32>
    %39 = arith.truncf %38 : vector<8x32xf32> to vector<8x32xbf16>
    %40 = arith.truncf %29 : vector<32x32xf32> to vector<32x32xbf16>
    %cst_26 = arith.constant dense<0.000000e+00> : vector<8x32xf32>
    %41 = tpu.matmul %39, %40, %cst_26 {dimension_numbers = #tpu.dot_dimension_numbers<[1], [0], [0], [1], [0, 0, 1, 1], [], []>} : vector<8x32xbf16>, vector<32x32xbf16>, vector<8x32xf32> -> vector<8x32xf32>
    %42 = vector.broadcast %31 : vector<1x32xf32> to vector<8x32xf32>
    %43 = arith.addf %41, %42 : vector<8x32xf32>
    %44 = arith.addf %43, %23 : vector<8x32xf32>
    %cst_27 = arith.constant 0.000000e+00 : f32
    %45 = vector.broadcast %cst_27 : f32 to vector<8x32xf32>
    %46 = arith.maximumf %44, %45 : vector<8x32xf32>
    %c4 = arith.constant 4 : index
    %c0_28 = arith.constant 0 : index
    %c0_29 = arith.constant 0 : index
    %47 = vector.load %arg2[%c4, %c0_28, %c0_29] : memref<7x33x32xf32, #tpu.memory_space<vmem>>, vector<1x32x32xf32>
    %48 = vector.shape_cast %47 : vector<1x32x32xf32> to vector<32x32xf32>
    %c4_30 = arith.constant 4 : index
    %c32_31 = arith.constant 32 : index
    %c0_32 = arith.constant 0 : index
    %49 = vector.load %arg2[%c4_30, %c32_31, %c0_32] : memref<7x33x32xf32, #tpu.memory_space<vmem>>, vector<1x1x32xf32>
    %50 = vector.shape_cast %49 : vector<1x1x32xf32> to vector<1x32xf32>
    %c5 = arith.constant 5 : index
    %c0_33 = arith.constant 0 : index
    %c0_34 = arith.constant 0 : index
    %51 = vector.load %arg2[%c5, %c0_33, %c0_34] : memref<7x33x32xf32, #tpu.memory_space<vmem>>, vector<1x32x32xf32>
    %52 = vector.shape_cast %51 : vector<1x32x32xf32> to vector<32x32xf32>
    %c5_35 = arith.constant 5 : index
    %c32_36 = arith.constant 32 : index
    %c0_37 = arith.constant 0 : index
    %53 = vector.load %arg2[%c5_35, %c32_36, %c0_37] : memref<7x33x32xf32, #tpu.memory_space<vmem>>, vector<1x1x32xf32>
    %54 = vector.shape_cast %53 : vector<1x1x32xf32> to vector<1x32xf32>
    %55 = arith.truncf %46 : vector<8x32xf32> to vector<8x32xbf16>
    %56 = arith.truncf %48 : vector<32x32xf32> to vector<32x32xbf16>
    %cst_38 = arith.constant dense<0.000000e+00> : vector<8x32xf32>
    %57 = tpu.matmul %55, %56, %cst_38 {dimension_numbers = #tpu.dot_dimension_numbers<[1], [0], [0], [1], [0, 0, 1, 1], [], []>} : vector<8x32xbf16>, vector<32x32xbf16>, vector<8x32xf32> -> vector<8x32xf32>
    %58 = vector.broadcast %50 : vector<1x32xf32> to vector<8x32xf32>
    %59 = arith.addf %57, %58 : vector<8x32xf32>
    %cst_39 = arith.constant 0.000000e+00 : f32
    %60 = vector.broadcast %cst_39 : f32 to vector<8x32xf32>
    %61 = arith.maximumf %59, %60 : vector<8x32xf32>
    %62 = arith.truncf %61 : vector<8x32xf32> to vector<8x32xbf16>
    %63 = arith.truncf %52 : vector<32x32xf32> to vector<32x32xbf16>
    %cst_40 = arith.constant dense<0.000000e+00> : vector<8x32xf32>
    %64 = tpu.matmul %62, %63, %cst_40 {dimension_numbers = #tpu.dot_dimension_numbers<[1], [0], [0], [1], [0, 0, 1, 1], [], []>} : vector<8x32xbf16>, vector<32x32xbf16>, vector<8x32xf32> -> vector<8x32xf32>
    %65 = vector.broadcast %54 : vector<1x32xf32> to vector<8x32xf32>
    %66 = arith.addf %64, %65 : vector<8x32xf32>
    %67 = arith.addf %66, %46 : vector<8x32xf32>
    %cst_41 = arith.constant 0.000000e+00 : f32
    %68 = vector.broadcast %cst_41 : f32 to vector<8x32xf32>
    %69 = arith.maximumf %67, %68 : vector<8x32xf32>
    %c6 = arith.constant 6 : index
    %c0_42 = arith.constant 0 : index
    %c0_43 = arith.constant 0 : index
    %70 = vector.load %arg2[%c6, %c0_42, %c0_43] : memref<7x33x32xf32, #tpu.memory_space<vmem>>, vector<1x1x32xf32>
    %71 = vector.shape_cast %70 : vector<1x1x32xf32> to vector<1x32xf32>
    %c6_44 = arith.constant 6 : index
    %c1_45 = arith.constant 1 : index
    %c0_46 = arith.constant 0 : index
    %72 = vector.load %arg2[%c6_44, %c1_45, %c0_46] : memref<7x33x32xf32, #tpu.memory_space<vmem>>, vector<1x1x32xf32>
    %73 = vector.shape_cast %72 : vector<1x1x32xf32> to vector<1x32xf32>
    %74 = vector.broadcast %71 : vector<1x32xf32> to vector<8x32xf32>
    %75 = arith.mulf %69, %74 : vector<8x32xf32>
    %76 = vector.broadcast %73 : vector<1x32xf32> to vector<8x32xf32>
    %77 = arith.addf %75, %76 : vector<8x32xf32>
    %cst_47 = arith.constant dense<0.000000e+00> : vector<8xf32>
    %78 = vector.multi_reduction <add>, %77, %cst_47 [1] : vector<8x32xf32> to vector<8xf32>
    %79 = vector.shape_cast %78 : vector<8xf32> to vector<8x1xf32>
    %80 = arith.negf %79 : vector<8x1xf32>
    %81 = math.exp %80 : vector<8x1xf32>
    %cst_48 = arith.constant 1.000000e+00 : f32
    %82 = vector.broadcast %cst_48 : f32 to vector<8x1xf32>
    %83 = arith.addf %82, %81 : vector<8x1xf32>
    %84 = arith.divf %82, %83 : vector<8x1xf32>
    %c0_49 = arith.constant 0 : index
    %c0_50 = arith.constant 0 : index
    %85 = vector.load %arg3[%c0_49, %c0_50] : memref<8x1xf32, #tpu.memory_space<vmem>>, vector<8x1xf32>
    tpu.vector_store %arg3[%c0_49, %c0_50], %84 {strides = array<i32>} : memref<8x1xf32, #tpu.memory_space<vmem>>, vector<8x1xf32>,
    return
  }
  func.func @transform_0(%arg0: i32) -> (i32, i32) {
    %c0_i32 = arith.constant 0 : i32
    %c0_i32_0 = arith.constant 0 : i32
    return %arg0, %c0_i32 : i32, i32
  }
  func.func @transform_1(%arg0: i32) -> (i32, i32, i32) {
    %c0_i32 = arith.constant 0 : i32
    %c0_i32_0 = arith.constant 0 : i32
    %c0_i32_1 = arith.constant 0 : i32
    %c0_i32_2 = arith.constant 0 : i32
    return %c0_i32, %c0_i32_0, %c0_i32_1 : i32, i32, i32
  }
  func.func @transform_2(%arg0: i32) -> (i32, i32) {
    %c0_i32 = arith.constant 0 : i32
    %c0_i32_0 = arith.constant 0 : i32
    return %arg0, %c0_i32 : i32, i32
  }
}

</mosaic_0001>

<llo_original>
// kernel: tpu_custom_call.1
$region0: #{tpu_custom_call.1}
  #allocation0 [shape = 'u32[]', space=smem, size = 0x4, offset = 0x4, fixed_abs, tag = 'smem constant byte address 0x4 - core index']
  #allocation1 [shape = 'u32[72,128]{1,0:T(1,128)}', space=vmem, size = 0x9000, scoped, tag = 'internal scratch']
  %s0 = inlined_call_operand.vmem [shape: f32[8,32], index: 0, kind: input, shape index: {}]
  %s1 = inlined_call_operand.vmem [shape: f32[7,33,32], index: 1, kind: input, shape index: {}]
  %s2 = inlined_call_operand.vmem [shape: f32[8,1], index: 2, kind: output, shape index: {}]
  %s3 = sld [smem:[#allocation0]]
  $region18: #{tpu_custom_call.1} parent=0
    _
  %s5 = ssub.s32 1, %s3
  %s6 = scalar_select 0, %s5, %s3
  // Predicated region
  $region2: #{tpu_custom_call.1} parent=0 // pred_check
    _
  $region3: #{tpu_custom_call.1} parent=0 // pred_check_branch
    %8 = sbr.rel (0) target = $region5
  $region4: #{tpu_custom_call.1} parent=0 // pred_region
    _
  $region5: #{tpu_custom_call.1} parent=0 // pred_fallthru
    _
  // Predicated region
  $region6: #{tpu_custom_call.1} parent=0 // pred_check
    _
  $region7: #{tpu_custom_call.1} parent=0 // pred_check_branch
    %10 = sbr.rel (0) target = $region9
  $region8: #{tpu_custom_call.1} parent=0 // pred_region
    _
  $region9: #{tpu_custom_call.1} parent=0 // pred_fallthru
    _
  %v12 = vld [vmem:[%s0] sm:$0xff]
  %v13 = vld [vmem:[%s1] sm:$0xff]
  %v14 = vld [vmem:[%s1 + $0x8] sm:$0xff]
  %v15 = vld [vmem:[%s1 + $0x10] sm:$0xff]
  %v16 = vld [vmem:[%s1 + $0x18] sm:$0xff]
  %v17 = vld [vmem:[%s1 + $0x20] sm:$0x1]
  %s18 = scalar_lea.vmem %s1, 40
  %v19 = vld [vmem:[%s18] sm:$0xff]
  %v20 = vld [vmem:[%s18 + $0x8] sm:$0xff]
  %v21 = vld [vmem:[%s18 + $0x10] sm:$0xff]
  %v22 = vld [vmem:[%s18 + $0x18] sm:$0xff]
  %v23 = vld [vmem:[%s18 + $0x20] sm:$0x1]
  %v24 = vpack.c.bf16 %v12, %v12
  %v25 = vpack.c.bf16 %v14, %v13
  %v26 = vpack.c.bf16 %v16, %v15
  %v27 = vperm.slane %v17, 0
  %vm28 = vcmask 261120
  %v30 = vsel %vm28, %v24, 0
  %32 = vmatpush.bf16.msra.mxu0 0
  %33 = vmatpush.bf16.msra.mxu0 0
  %34 = vmatpush.bf16.msra.mxu0 0
  %35 = vmatpush.bf16.msra.mxu0 0
  %36 = vmatpush.bf16.msra.mxu0 0
  %37 = vmatpush.bf16.msra.mxu0 0
  %38 = vmatpush.bf16.msra.mxu0 %v26
  %39 = vmatpush.bf16.msra.mxu0 %v25
  %40 = vmatmul.bf16.gmra.mxu0 %v30
  %v41 = vpop.f32.mrf.mxu0
  %v42 = vadd.f32 %v27, %v41
  %v43 = vpop.f32.mrf.mxu0
  %44 = vdwg.mxu0
  %v45 = vmax.f32 %v42, 0.0
  %v46 = vpack.c.bf16 %v45, %v45
  %v47 = vpack.c.bf16 %v20, %v19
  %v48 = vpack.c.bf16 %v22, %v21
  %v49 = vperm.slane %v23, 0
  %v51 = vsel %vm28, %v46, 0
  %53 = vmatpush.bf16.msra.mxu0 0
  %54 = vmatpush.bf16.msra.mxu0 0
  %55 = vmatpush.bf16.msra.mxu0 0
  %56 = vmatpush.bf16.msra.mxu0 0
  %57 = vmatpush.bf16.msra.mxu0 0
  %58 = vmatpush.bf16.msra.mxu0 0
  %59 = vmatpush.bf16.msra.mxu0 %v48
  %60 = vmatpush.bf16.msra.mxu0 %v47
  %61 = vmatmul.bf16.gmra.mxu0 %v51
  %v62 = vpop.f32.mrf.mxu0
  %v63 = vadd.f32 %v49, %v62
  %v64 = vpop.f32.mrf.mxu0
  %65 = vdwg.mxu0
  %v66 = vadd.f32 %v63, %v12
  %v67 = vmax.f32 %v66, 0.0
  %s68 = scalar_lea.vmem %s1, 80
  %v69 = vld [vmem:[%s68] sm:$0xff]
  %v70 = vld [vmem:[%s68 + $0x8] sm:$0xff]
  %v71 = vld [vmem:[%s68 + $0x10] sm:$0xff]
  %v72 = vld [vmem:[%s68 + $0x18] sm:$0xff]
  %v73 = vld [vmem:[%s68 + $0x20] sm:$0x1]
  %s74 = scalar_lea.vmem %s1, 120
  %v75 = vld [vmem:[%s74] sm:$0xff]
  %v76 = vld [vmem:[%s74 + $0x8] sm:$0xff]
  %v77 = vld [vmem:[%s74 + $0x10] sm:$0xff]
  %v78 = vld [vmem:[%s74 + $0x18] sm:$0xff]
  %v79 = vld [vmem:[%s74 + $0x20] sm:$0x1]
  %v80 = vpack.c.bf16 %v67, %v67
  %v81 = vpack.c.bf16 %v70, %v69
  %v82 = vpack.c.bf16 %v72, %v71
  %v83 = vperm.slane %v73, 0
  %v85 = vsel %vm28, %v80, 0
  %87 = vmatpush.bf16.msra.mxu0 0
  %88 = vmatpush.bf16.msra.mxu0 0
  %89 = vmatpush.bf16.msra.mxu0 0
  %90 = vmatpush.bf16.msra.mxu0 0
  %91 = vmatpush.bf16.msra.mxu0 0
  %92 = vmatpush.bf16.msra.mxu0 0
  %93 = vmatpush.bf16.msra.mxu0 %v82
  %94 = vmatpush.bf16.msra.mxu0 %v81
  %95 = vmatmul.bf16.gmra.mxu0 %v85
  %v96 = vpop.f32.mrf.mxu0
  %v97 = vadd.f32 %v83, %v96
  %v98 = vpop.f32.mrf.mxu0
  %99 = vdwg.mxu0
  %v100 = vmax.f32 %v97, 0.0
  %v101 = vpack.c.bf16 %v100, %v100
  %v102 = vpack.c.bf16 %v76, %v75
  %v103 = vpack.c.bf16 %v78, %v77
  %v104 = vperm.slane %v79, 0
  %v106 = vsel %vm28, %v101, 0
  %108 = vmatpush.bf16.msra.mxu0 0
  %109 = vmatpush.bf16.msra.mxu0 0
  %110 = vmatpush.bf16.msra.mxu0 0
  %111 = vmatpush.bf16.msra.mxu0 0
  %112 = vmatpush.bf16.msra.mxu0 0
  %113 = vmatpush.bf16.msra.mxu0 0
  %114 = vmatpush.bf16.msra.mxu0 %v103
  %115 = vmatpush.bf16.msra.mxu0 %v102
  %116 = vmatmul.bf16.gmra.mxu0 %v106
  %v117 = vpop.f32.mrf.mxu0
  %v118 = vadd.f32 %v104, %v117
  %v119 = vpop.f32.mrf.mxu0
  %120 = vdwg.mxu0
  %v121 = vadd.f32 %v118, %v67
  %v122 = vmax.f32 %v121, 0.0
  %s123 = scalar_lea.vmem %s1, 160
  %v124 = vld [vmem:[%s123] sm:$0xff]
  %v125 = vld [vmem:[%s123 + $0x8] sm:$0xff]
  %v126 = vld [vmem:[%s123 + $0x10] sm:$0xff]
  %v127 = vld [vmem:[%s123 + $0x18] sm:$0xff]
  %v128 = vld [vmem:[%s123 + $0x20] sm:$0x1]
  %s129 = scalar_lea.vmem %s1, 200
  %v130 = vld [vmem:[%s129] sm:$0xff]
  %v131 = vld [vmem:[%s129 + $0x8] sm:$0xff]
  %v132 = vld [vmem:[%s129 + $0x10] sm:$0xff]
  %v133 = vld [vmem:[%s129 + $0x18] sm:$0xff]
  %v134 = vld [vmem:[%s129 + $0x20] sm:$0x1]
  %v135 = vpack.c.bf16 %v122, %v122
  %v136 = vpack.c.bf16 %v125, %v124
  %v137 = vpack.c.bf16 %v127, %v126
  %v138 = vperm.slane %v128, 0
  %v140 = vsel %vm28, %v135, 0
  %142 = vmatpush.bf16.msra.mxu0 0
  %143 = vmatpush.bf16.msra.mxu0 0
  %144 = vmatpush.bf16.msra.mxu0 0
  %145 = vmatpush.bf16.msra.mxu0 0
  %146 = vmatpush.bf16.msra.mxu0 0
  %147 = vmatpush.bf16.msra.mxu0 0
  %148 = vmatpush.bf16.msra.mxu0 %v137
  %149 = vmatpush.bf16.msra.mxu0 %v136
  %150 = vmatmul.bf16.gmra.mxu0 %v140
  %v151 = vpop.f32.mrf.mxu0
  %v152 = vadd.f32 %v138, %v151
  %v153 = vpop.f32.mrf.mxu0
  %154 = vdwg.mxu0
  %v155 = vmax.f32 %v152, 0.0
  %v156 = vpack.c.bf16 %v155, %v155
  %v157 = vpack.c.bf16 %v131, %v130
  %v158 = vpack.c.bf16 %v133, %v132
  %v159 = vperm.slane %v134, 0
  %v161 = vsel %vm28, %v156, 0
  %163 = vmatpush.bf16.msra.mxu0 0
  %164 = vmatpush.bf16.msra.mxu0 0
  %165 = vmatpush.bf16.msra.mxu0 0
  %166 = vmatpush.bf16.msra.mxu0 0
  %167 = vmatpush.bf16.msra.mxu0 0
  %168 = vmatpush.bf16.msra.mxu0 0
  %169 = vmatpush.bf16.msra.mxu0 %v158
  %170 = vmatpush.bf16.msra.mxu0 %v157
  %171 = vmatmul.bf16.gmra.mxu0 %v161
  %v172 = vpop.f32.mrf.mxu0
  %v173 = vadd.f32 %v159, %v172
  %v174 = vpop.f32.mrf.mxu0
  %175 = vdwg.mxu0
  %v176 = vadd.f32 %v173, %v122
  %v177 = vmax.f32 %v176, 0.0
  %s178 = scalar_lea.vmem %s1, 240
  %v179 = vld [vmem:[%s178] sm:$0x1]
  %v180 = vld [vmem:[%s178 + $0x1] sm:$0x1]
  %v181 = vperm.slane %v179, 0
  %v182 = vmul.f32 %v177, %v181
  %v183 = vperm.slane %v180, 0
  %v184 = vadd.f32 %v182, %v183
  %v185 = vsel %vm28, %v184, 0.0
  %186 = vadd.xlane.f32.xlu0 %v185
  %v187 = vpop.xlane.xlu0 %186
  %v188 = vxor.u32 %v187, 2147483648
  %v189 = vmul.f32 %v188, 1.442695
  %v190 = vpow.pop %v189
  %v191 = vadd.f32 %v190, 1.0
  %v192 = vrcp.pop %v191
  %v193 = vmul.f32 %v191, %v192
  %v194 = vsub.f32 1.0, %v193
  %v195 = vmul.f32 %v192, %v194
  %v196 = vadd.f32 %v192, %v195
  %vm197 = vweird.f32 %v191
  %vm198 = vweird.f32 %v192
  %vm199 = vmor %vm197, %vm198
  %v200 = vsel %vm199, %v192, %v196
  %v201 = vand.u32 2147483647, %v191
  %vm202 = vcmp.eq.f32.partialorder %v201, 8.507059e+37
  %v203 = vand.u32 %v191, 2147483648
  %v204 = vor.u32 1.1754944e-38, %v203
  %v205 = vsel %vm202, %v204, %v200
  %v206 = vmul.f32 1.0, %v205
  %vm207 = vcmask 7168
  %208 = vst.msk [vmem:[%s2] sm:$0xff] %vm207, %v206
  // Predicated region
  $region10: #{tpu_custom_call.1} parent=0 // pred_check
    _
  $region11: #{tpu_custom_call.1} parent=0 // pred_check_branch
    %210 = sbr.rel (0) target = $region13
  $region12: #{tpu_custom_call.1} parent=0 // pred_region
    _
  $region13: #{tpu_custom_call.1} parent=0 // pred_fallthru
    _
  // Predicated region
  $region14: #{tpu_custom_call.1} parent=0 // pred_check
    _
  $region15: #{tpu_custom_call.1} parent=0 // pred_check_branch
    %212 = sbr.rel (0) target = $region17
  $region16: #{tpu_custom_call.1} parent=0 // pred_region
    _
  $region17: #{tpu_custom_call.1} parent=0 // pred_fallthru
    _

</llo_original>
